<compile_context>
chip_gen: v7x
topology: tpu7x:2x2x1
jax: 0.10.0
libtpu: 0.0.40
codegen_flags: <defaults>
</compile_context>

<pallas_src>
import functools

import jax
import jax.numpy as jnp
from jax import lax
from jax.experimental import pallas as pl
from jax.experimental.pallas import tpu as pltpu


def coda_prompt_kernel(x_ref, wnum_ref, wsq_ref, pk_ref, pv_ref, ek_ref, ev_ref):
    eps = 1e-12  # matches torch.nn.functional.normalize default eps

    x = x_ref[...].astype(jnp.float32)          # (tb, D) f32
    xb = x.astype(jnp.bfloat16)                 # MXU operand
    x2b = (x * x).astype(jnp.bfloat16)          # square in f32, cast for MXU

    # Numerator:   sum_d x[b,d] * A[k,d] * n_K[k,d]    -> (tb, f_pad) MXU matmul
    num = jnp.dot(xb, wnum_ref[...], preferred_element_type=jnp.float32)
    # Denominator: ||x[b,:]*A[k,:]||^2 = (x^2) @ (A^2)  -> (tb, f_pad) MXU matmul
    sq = jnp.dot(x2b, wsq_ref[...], preferred_element_type=jnp.float32)

    # aq_k = num / max(sqrt(sq), eps) == num * rsqrt(max(sq, eps^2))  (EUP rsqrt, no divide)
    aq_k = (num * lax.rsqrt(jnp.maximum(sq, eps * eps))).astype(jnp.bfloat16)

    # P_ split into Ek / Ev directly: two lane-dense matmuls / stores.
    ek_ref[...] = jnp.dot(aq_k, pk_ref[...],
                          preferred_element_type=jnp.float32).astype(ek_ref.dtype)
    ev_ref[...] = jnp.dot(aq_k, pv_ref[...],
                          preferred_element_type=jnp.float32).astype(ev_ref.dtype)


def coda_prompt_forward(x_querry, K, A, p, e_p_length, *, batch_tile=256,
                        out_dtype=jnp.float32):
    """Pallas implementation of CodaPrompt.forward for one layer l in e_layers.

    K, A: (f, key_d), p: (f, L, emb_d), already concatenated and sliced to
    f = task_count * prompt_per_task (glue, like the torch cat/[:f] slice).
    Returns [Ek, Ev] with shapes (B, i, emb_d) / (B, L-i, emb_d), i = e_p_length // 2.
    """
    eps = 1e-12
    B, D = x_querry.shape
    f, L, E = p.shape
    LE = L * E
    i = e_p_length // 2
    iE, vE = i * E, (L - i) * E

    # ---- batch-invariant weight prep: once per call (wrapper-side), f32 norm path ----
    Kf = K.astype(jnp.float32)
    Af = A.astype(jnp.float32)
    n_K = Kf / jnp.maximum(jnp.linalg.norm(Kf, axis=1, keepdims=True), eps)
    W_num = (Af * n_K).T                         # (D, f) -- pre-transposed, no in-kernel .T
    W_sq = (Af * Af).T                           # (D, f)

    # Pad f up to a multiple of 128 (full-width lanes / clean MXU contraction depth).
    # Zero-padded columns give num = 0, sq = 0 -> aq_k = 0, and zero prompt rows -> exact 0.
    f_pad = ((f + 127) // 128) * 128
    if f_pad != f:
        padw = f_pad - f
        W_num = jnp.pad(W_num, ((0, 0), (0, padw)))
        W_sq = jnp.pad(W_sq, ((0, 0), (0, padw)))
        p = jnp.pad(p, ((0, padw), (0, 0), (0, 0)))
    W_num = W_num.astype(jnp.bfloat16)
    W_sq = W_sq.astype(jnp.bfloat16)
    p2 = p.reshape(f_pad, LE).astype(jnp.bfloat16)
    pk2 = p2[:, :iE]                              # (f_pad, i*E)   -> Ek weights
    pv2 = p2[:, iE:]                              # (f_pad, (L-i)*E) -> Ev weights

    # ---- batch tiling: resident weights + double-buffered x / Ek / Ev tiles ----
    tb = min(batch_tile, B)
    B_pad = pl.cdiv(B, tb) * tb
    xq = x_querry.astype(jnp.float32)
    if B_pad != B:
        xq = jnp.pad(xq, ((0, B_pad - B), (0, 0)))
    grid = (B_pad // tb,)

    # VMEM budget: residents (bf16, double-buffered by the pipeline) + f32 x/out streams
    # (double-buffered) + (tb, f_pad) temporaries.  Cap at 48 MiB so it fits v7x's 64 MiB/TC.
    resident_bytes = (2 * D * f_pad + f_pad * LE) * 2
    stream_bytes = 2 * tb * (D + LE) * 4
    temp_bytes = 4 * tb * f_pad * 4
    vmem_limit = int(min(max((2 * resident_bytes + stream_bytes + temp_bytes) * 3 // 2,
                             8 << 20), 48 << 20))

    cost = pl.CostEstimate(
        flops=2 * B_pad * f_pad * (2 * D + LE),
        transcendentals=B_pad * f_pad,                     # rsqrt
        bytes_accessed=(B_pad * D * 4 + 2 * D * f_pad * 2
                        + f_pad * LE * 2 + B_pad * LE * 4),
    )

    ek, ev = pl.pallas_call(
        coda_prompt_kernel,
        out_shape=(jax.ShapeDtypeStruct((B_pad, iE), out_dtype),
                   jax.ShapeDtypeStruct((B_pad, vE), out_dtype)),
        grid_spec=pltpu.PrefetchScalarGridSpec(
            num_scalar_prefetch=0,
            grid=grid,
            in_specs=[
                pl.BlockSpec((tb, D), lambda b: (b, 0)),        # x     : batch-tiled
                pl.BlockSpec((D, f_pad), lambda b: (0, 0)),     # W_num : resident
                pl.BlockSpec((D, f_pad), lambda b: (0, 0)),     # W_sq  : resident
                pl.BlockSpec((f_pad, iE), lambda b: (0, 0)),    # p (Ek cols) : resident
                pl.BlockSpec((f_pad, vE), lambda b: (0, 0)),    # p (Ev cols) : resident
            ],
            out_specs=[
                pl.BlockSpec((tb, iE), lambda b: (b, 0)),       # Ek : batch-tiled
                pl.BlockSpec((tb, vE), lambda b: (b, 0)),       # Ev : batch-tiled
            ],
        ),
        compiler_params=pltpu.CompilerParams(
            dimension_semantics=("parallel",),
            vmem_limit_bytes=vmem_limit,
        ),
        cost_estimate=cost,
    )(xq, W_num, W_sq, pk2, pv2)

    Ek = ek[:B].reshape(B, i, E)
    Ev = ev[:B].reshape(B, L - i, E)
    return [Ek, Ev]


def reference_forward(x_querry, K, A, p, e_p_length):
    """Pure-JAX reference mirroring the torch forward, for correctness check."""
    eps = 1e-12
    n_K = K / jnp.maximum(jnp.linalg.norm(K, axis=1, keepdims=True), eps)
    aq = jnp.einsum('bd,kd->bkd', x_querry, A)
    q = aq / jnp.maximum(jnp.linalg.norm(aq, axis=2, keepdims=True), eps)
    aq_k = jnp.einsum('bkd,kd->bk', q, n_K)
    P_ = jnp.einsum('bk,kld->bld', aq_k, p)
    i = e_p_length // 2
    return [P_[:, :i, :], P_[:, i:, :]]


if __name__ == "__main__":
    # Small, CodaPrompt-consistent shapes.
    emb_d = 32
    key_dim = 32
    n_tasks = 2
    prompt_per_task = 4
    prompt_length = 8      # e_p_length
    task_count = 2         # pretend next_task() was called n_tasks times
    f = task_count * prompt_per_task   # active prompts (K/A/p sliced to [:f])
    B = 2

    key = jax.random.PRNGKey(0)
    kx, kK, kA, kp = jax.random.split(key, 4)

    # Deterministic synthetic parameter init (tensor_prompt uses uniform_()).
    # TODO(synk): init-time gram_schmidt re-orthonormalization, next_task bookkeeping and
    # orth_loss are training/init-time only (they affect parameter values, not forward math).
    x_querry = jax.random.normal(kx, (B, key_dim), dtype=jnp.float32)
    K_full = jax.random.uniform(kK, (prompt_per_task * n_tasks, key_dim), dtype=jnp.float32)
    A_full = jax.random.uniform(kA, (prompt_per_task * n_tasks, key_dim), dtype=jnp.float32)
    p_full = jax.random.uniform(kp, (prompt_per_task * n_tasks, prompt_length, emb_d),
                                dtype=jnp.float32)

    # torch: cat(list(K)) then slice [:f]  (glue, not kernel work)
    K = K_full[:f]
    A = A_full[:f]
    p = p_full[:f]

    fwd = jax.jit(functools.partial(coda_prompt_forward, e_p_length=prompt_length))
    Ek, Ev = fwd(x_querry, K, A, p)
    jax.block_until_ready(Ek)
    jax.block_until_ready(Ev)

    Ek_ref, Ev_ref = reference_forward(x_querry, K, A, p, prompt_length)
    assert Ek.shape == (B, prompt_length // 2, emb_d)
    assert Ev.shape == (B, prompt_length - prompt_length // 2, emb_d)
    # bf16 MXU operands with f32 accumulation -> looser tolerance than a pure-f32 kernel.
    assert jnp.allclose(Ek, Ek_ref, atol=3e-2, rtol=3e-2)
    assert jnp.allclose(Ev, Ev_ref, atol=3e-2, rtol=3e-2)

    print("KERNEL_OK")
</pallas_src>

<mosaic_0001>
module attributes {stable_mosaic.version = 11 : i64} {
  func.func @coda_prompt_kernel(%arg0: i32, %arg1: memref<2x32xf32, #tpu.memory_space<vmem>>, %arg2: memref<32x128xbf16, #tpu.memory_space<vmem>>, %arg3: memref<32x128xbf16, #tpu.memory_space<vmem>>, %arg4: memref<128x128xbf16, #tpu.memory_space<vmem>>, %arg5: memref<128x128xbf16, #tpu.memory_space<vmem>>, %arg6: memref<2x128xf32, #tpu.memory_space<vmem>>, %arg7: memref<2x128xf32, #tpu.memory_space<vmem>>) attributes {dimension_semantics = [#tpu.dimension_semantics<parallel>], iteration_bounds = array<i64: 1>, scalar_prefetch = 0 : i64, scratch_operands = 0 : i64, tpu.core_type = #tpu.core_type<tc>, window_params = [{transform_indices = @transform_0, window_bounds = array<i64: 2, 32>}, {pipeline_mode = #tpu.pipeline_mode<synchronous>, transform_indices = @transform_1, window_bounds = array<i64: 32, 128>}, {pipeline_mode = #tpu.pipeline_mode<synchronous>, transform_indices = @transform_2, window_bounds = array<i64: 32, 128>}, {pipeline_mode = #tpu.pipeline_mode<synchronous>, transform_indices = @transform_3, window_bounds = array<i64: 128, 128>}, {pipeline_mode = #tpu.pipeline_mode<synchronous>, transform_indices = @transform_4, window_bounds = array<i64: 128, 128>}, {transform_indices = @transform_5, window_bounds = array<i64: 2, 128>}, {transform_indices = @transform_6, window_bounds = array<i64: 2, 128>}]} {
    %c0 = arith.constant 0 : index
    %c0_0 = arith.constant 0 : index
    %0 = vector.load %arg1[%c0, %c0_0] : memref<2x32xf32, #tpu.memory_space<vmem>>, vector<2x32xf32>
    %1 = arith.truncf %0 : vector<2x32xf32> to vector<2x32xbf16>
    %2 = arith.mulf %0, %0 : vector<2x32xf32>
    %3 = arith.truncf %2 : vector<2x32xf32> to vector<2x32xbf16>
    %c0_1 = arith.constant 0 : index
    %c0_2 = arith.constant 0 : index
    %4 = vector.load %arg2[%c0_1, %c0_2] : memref<32x128xbf16, #tpu.memory_space<vmem>>, vector<32x128xbf16>
    %cst = arith.constant dense<0.000000e+00> : vector<2x128xf32>
    %5 = tpu.matmul %1, %4, %cst {dimension_numbers = #tpu.dot_dimension_numbers<[1], [0], [0], [1], [0, 0, 1, 1], [], []>} : vector<2x32xbf16>, vector<32x128xbf16>, vector<2x128xf32> -> vector<2x128xf32>
    %c0_3 = arith.constant 0 : index
    %c0_4 = arith.constant 0 : index
    %6 = vector.load %arg3[%c0_3, %c0_4] : memref<32x128xbf16, #tpu.memory_space<vmem>>, vector<32x128xbf16>
    %cst_5 = arith.constant dense<0.000000e+00> : vector<2x128xf32>
    %7 = tpu.matmul %3, %6, %cst_5 {dimension_numbers = #tpu.dot_dimension_numbers<[1], [0], [0], [1], [0, 0, 1, 1], [], []>} : vector<2x32xbf16>, vector<32x128xbf16>, vector<2x128xf32> -> vector<2x128xf32>
    %cst_6 = arith.constant 1.000000e-24 : f32
    %8 = vector.broadcast %cst_6 : f32 to vector<2x128xf32>
    %9 = arith.maximumf %7, %8 : vector<2x128xf32>
    %10 = math.rsqrt %9 : vector<2x128xf32>
    %11 = arith.mulf %5, %10 : vector<2x128xf32>
    %12 = arith.truncf %11 : vector<2x128xf32> to vector<2x128xbf16>
    %c0_7 = arith.constant 0 : index
    %c0_8 = arith.constant 0 : index
    %13 = vector.load %arg4[%c0_7, %c0_8] : memref<128x128xbf16, #tpu.memory_space<vmem>>, vector<128x128xbf16>
    %cst_9 = arith.constant dense<0.000000e+00> : vector<2x128xf32>
    %14 = tpu.matmul %12, %13, %cst_9 {dimension_numbers = #tpu.dot_dimension_numbers<[1], [0], [0], [1], [0, 0, 1, 1], [], []>} : vector<2x128xbf16>, vector<128x128xbf16>, vector<2x128xf32> -> vector<2x128xf32>
    %c0_10 = arith.constant 0 : index
    %c0_11 = arith.constant 0 : index
    %15 = vector.load %arg6[%c0_10, %c0_11] : memref<2x128xf32, #tpu.memory_space<vmem>>, vector<2x128xf32>
    tpu.vector_store %arg6[%c0_10, %c0_11], %14 {strides = array<i32>} : memref<2x128xf32, #tpu.memory_space<vmem>>, vector<2x128xf32>,
    %c0_12 = arith.constant 0 : index
    %c0_13 = arith.constant 0 : index
    %16 = vector.load %arg5[%c0_12, %c0_13] : memref<128x128xbf16, #tpu.memory_space<vmem>>, vector<128x128xbf16>
    %cst_14 = arith.constant dense<0.000000e+00> : vector<2x128xf32>
    %17 = tpu.matmul %12, %16, %cst_14 {dimension_numbers = #tpu.dot_dimension_numbers<[1], [0], [0], [1], [0, 0, 1, 1], [], []>} : vector<2x128xbf16>, vector<128x128xbf16>, vector<2x128xf32> -> vector<2x128xf32>
    %c0_15 = arith.constant 0 : index
    %c0_16 = arith.constant 0 : index
    %18 = vector.load %arg7[%c0_15, %c0_16] : memref<2x128xf32, #tpu.memory_space<vmem>>, vector<2x128xf32>
    tpu.vector_store %arg7[%c0_15, %c0_16], %17 {strides = array<i32>} : memref<2x128xf32, #tpu.memory_space<vmem>>, vector<2x128xf32>,
    return
  }
  func.func @transform_0(%arg0: i32) -> (i32, i32) {
    %c0_i32 = arith.constant 0 : i32
    %c0_i32_0 = arith.constant 0 : i32
    return %arg0, %c0_i32 : i32, i32
  }
  func.func @transform_1(%arg0: i32) -> (i32, i32) {
    %c0_i32 = arith.constant 0 : i32
    %c0_i32_0 = arith.constant 0 : i32
    %c0_i32_1 = arith.constant 0 : i32
    return %c0_i32, %c0_i32_0 : i32, i32
  }
  func.func @transform_2(%arg0: i32) -> (i32, i32) {
    %c0_i32 = arith.constant 0 : i32
    %c0_i32_0 = arith.constant 0 : i32
    %c0_i32_1 = arith.constant 0 : i32
    return %c0_i32, %c0_i32_0 : i32, i32
  }
  func.func @transform_3(%arg0: i32) -> (i32, i32) {
    %c0_i32 = arith.constant 0 : i32
    %c0_i32_0 = arith.constant 0 : i32
    %c0_i32_1 = arith.constant 0 : i32
    return %c0_i32, %c0_i32_0 : i32, i32
  }
  func.func @transform_4(%arg0: i32) -> (i32, i32) {
    %c0_i32 = arith.constant 0 : i32
    %c0_i32_0 = arith.constant 0 : i32
    %c0_i32_1 = arith.constant 0 : i32
    return %c0_i32, %c0_i32_0 : i32, i32
  }
  func.func @transform_5(%arg0: i32) -> (i32, i32) {
    %c0_i32 = arith.constant 0 : i32
    %c0_i32_0 = arith.constant 0 : i32
    return %arg0, %c0_i32 : i32, i32
  }
  func.func @transform_6(%arg0: i32) -> (i32, i32) {
    %c0_i32 = arith.constant 0 : i32
    %c0_i32_0 = arith.constant 0 : i32
    return %arg0, %c0_i32 : i32, i32
  }
}

</mosaic_0001>

<llo_original>
// kernel: mul.5
$region0: #{mul.5}
  #allocation0 [shape = 's32[1]{0}', space=sflag, size = 0x4, scoped, tag = 'scoped memory for mul.5']
  %s0 = inlined_call_operand.vmem [shape: f32[8,32], index: 0, kind: input, shape index: {}, may-alias: {0,1}]
  %s1 = inlined_call_operand.vmem [shape: f32[8,32], index: 1, kind: input, shape index: {}, may-alias: {0,1}]
  %s2 = inlined_call_operand.vmem [shape: bf16[8,32], index: 2, kind: output, shape index: {}]
  %v3 = vld [vmem:[%s0] sm:$0xff]
  %v4 = vld [vmem:[%s1] sm:$0xff]
  %5 = xla_tuple %v3, %v4
  %6 = xla_tuple %5
  %v7 = vmul.f32 %v3, %v4
  %8 = xla_tuple %v7
  %v9 = vpack.c.bf16 0.0, %v7
  %10 = vst [vmem:[%s2] sm:$0xf] %v9

// kernel: coda_prompt_forward.1
$region0: #{coda_prompt_forward.1}
  #allocation0 [shape = 'u32[]', space=smem, size = 0x4, offset = 0x4, fixed_abs, tag = 'smem constant byte address 0x4 - core index']
  #allocation1 [shape = 'u32[144,128]{1,0:T(1,128)}', space=vmem, size = 0x12000, scoped, tag = 'internal scratch']
  %s0 = inlined_call_operand.vmem [shape: f32[2,32], index: 0, kind: input, shape index: {}]
  %s1 = inlined_call_operand.vmem [shape: bf16[32,128], index: 1, kind: input, shape index: {}]
  %s2 = inlined_call_operand.vmem [shape: bf16[32,128], index: 2, kind: input, shape index: {}]
  %s3 = inlined_call_operand.vmem [shape: bf16[128,128], index: 3, kind: input, shape index: {}]
  %s4 = inlined_call_operand.vmem [shape: bf16[128,128], index: 4, kind: input, shape index: {}]
  %s5 = inlined_call_operand.vmem [shape: f32[2,128], index: 5, kind: output, shape index: {0}]
  %s6 = inlined_call_operand.vmem [shape: f32[2,128], index: 6, kind: output, shape index: {1}]
  %7 = xla_tuple %s5, %s6
  %s8 = sld [smem:[#allocation0]]
  $region38: #{coda_prompt_forward.1} parent=0
    _
  %s10 = ssub.s32 1, %s8
  %s11 = scalar_select 0, %s10, %s8
  // Predicated region
  $region2: #{coda_prompt_forward.1} parent=0 // pred_check
    _
  $region3: #{coda_prompt_forward.1} parent=0 // pred_check_branch
    %13 = sbr.rel (0) target = $region5
  $region4: #{coda_prompt_forward.1} parent=0 // pred_region
    _
  $region5: #{coda_prompt_forward.1} parent=0 // pred_fallthru
    _
  // Predicated region
  $region6: #{coda_prompt_forward.1} parent=0 // pred_check
    _
  $region7: #{coda_prompt_forward.1} parent=0 // pred_check_branch
    %15 = sbr.rel (0) target = $region9
  $region8: #{coda_prompt_forward.1} parent=0 // pred_region
    _
  $region9: #{coda_prompt_forward.1} parent=0 // pred_fallthru
    _
  // Predicated region
  $region10: #{coda_prompt_forward.1} parent=0 // pred_check
    _
  $region11: #{coda_prompt_forward.1} parent=0 // pred_check_branch
    %17 = sbr.rel (0) target = $region13
  $region12: #{coda_prompt_forward.1} parent=0 // pred_region
    _
  $region13: #{coda_prompt_forward.1} parent=0 // pred_fallthru
    _
  // Predicated region
  $region14: #{coda_prompt_forward.1} parent=0 // pred_check
    _
  $region15: #{coda_prompt_forward.1} parent=0 // pred_check_branch
    %19 = sbr.rel (0) target = $region17
  $region16: #{coda_prompt_forward.1} parent=0 // pred_region
    _
  $region17: #{coda_prompt_forward.1} parent=0 // pred_fallthru
    _
  // Predicated region
  $region18: #{coda_prompt_forward.1} parent=0 // pred_check
    _
  $region19: #{coda_prompt_forward.1} parent=0 // pred_check_branch
    %21 = sbr.rel (0) target = $region21
  $region20: #{coda_prompt_forward.1} parent=0 // pred_region
    _
  $region21: #{coda_prompt_forward.1} parent=0 // pred_fallthru
    _
  %v23 = vld [vmem:[%s0] sm:$0x3]
  %v24 = vpack.c.bf16 %v23, %v23
  %v25 = vmul.f32 %v23, %v23
  %v26 = vpack.c.bf16 %v25, %v25
  %v27 = vld [vmem:[%s1] sm:$0xf]
  %v28 = vld [vmem:[%s1 + $0x4] sm:$0xf]
  %v29 = vld [vmem:[%s1 + $0x8] sm:$0xf]
  %v30 = vld [vmem:[%s1 + $0xc] sm:$0xf]
  %v35 = vunpack.c.l.b16 %v27
  %v36 = vunpack.c.l.b16 %v28
  %v37 = vunpack.c.l.b16 %v29
  %v38 = vunpack.c.l.b16 %v30
  %v39 = vpack.c.b16 %v36, %v35
  %v40 = vpack.c.b16 %v38, %v37
  %vm43 = vcmask 261120
  %v45 = vsel %vm43, %v24, 0
  %47 = vmatprep.subr.bf16.mxu0 0
  %48 = vmatpush1.bf16.msra.mxu0 %v39
  %49 = vmatprep.subr.bf16.mxu0 0
  %50 = vmatpush1.bf16.msra.mxu0 %v40
  %51 = vmatprep.subr.bf16.mxu0 0
  %52 = vmatpush1.bf16.msra.mxu0 0
  %53 = vmatprep.subr.bf16.mxu0 0
  %54 = vmatpush1.bf16.msra.mxu0 0
  %55 = vmatprep.subr.bf16.mxu0 0
  %56 = vmatpush1.bf16.msra.mxu0 0
  %57 = vmatprep.subr.bf16.mxu0 0
  %58 = vmatpush1.bf16.msra.mxu0 0
  %59 = vmatprep.subr.bf16.mxu0 0
  %60 = vmatpush1.bf16.msra.mxu0 0
  %61 = vmatprep.subr.bf16.mxu0 0
  %62 = vmatpush1.bf16.msra.mxu0 0
  %63 = vmatprep.subr.bf16.mxu0 0
  %64 = vmatpush1.bf16.msra.mxu0 0
  %65 = vmatprep.subr.bf16.mxu0 0
  %66 = vmatpush1.bf16.msra.mxu0 0
  %67 = vmatprep.subr.bf16.mxu0 0
  %68 = vmatpush1.bf16.msra.mxu0 0
  %69 = vmatprep.subr.bf16.mxu0 0
  %70 = vmatpush1.bf16.msra.mxu0 0
  %71 = vmatprep.subr.bf16.mxu0 0
  %72 = vmatpush1.bf16.msra.mxu0 0
  %73 = vmatprep.subr.bf16.mxu0 0
  %74 = vmatpush1.bf16.msra.mxu0 0
  %75 = vmatprep.subr.bf16.mxu0 0
  %76 = vmatpush1.bf16.msra.mxu0 0
  %77 = vmatprep.subr.bf16.mxu0 0
  %78 = vmatpush1.bf16.msra.mxu0 0
  %79 = vmatprep.mubr.bf16.mxu0 0
  %80 = vmatmul.mubr.bf16.gmra.mrb[0].mxu0 %v45
  %v81 = vpop.f32.mrb[0].mxu0
  %v82 = vadd.f32 0.0, %v81
  %v83 = vpop.f32.mrb[0].mxu0
  %v84 = vpop.f32.mrb[0].mxu0
  %v85 = vpop.f32.mrb[0].mxu0
  %86 = vdwg.mxu0
  %v87 = vld [vmem:[%s2] sm:$0xf]
  %v88 = vld [vmem:[%s2 + $0x4] sm:$0xf]
  %v89 = vld [vmem:[%s2 + $0x8] sm:$0xf]
  %v90 = vld [vmem:[%s2 + $0xc] sm:$0xf]
  %v95 = vunpack.c.l.b16 %v87
  %v96 = vunpack.c.l.b16 %v88
  %v97 = vunpack.c.l.b16 %v89
  %v98 = vunpack.c.l.b16 %v90
  %v99 = vpack.c.b16 %v96, %v95
  %v100 = vpack.c.b16 %v98, %v97
  %v104 = vsel %vm43, %v26, 0
  %106 = vmatprep.subr.bf16.mxu0 0
  %107 = vmatpush1.bf16.msra.mxu0 %v99
  %108 = vmatprep.subr.bf16.mxu0 0
  %109 = vmatpush1.bf16.msra.mxu0 %v100
  %110 = vmatprep.subr.bf16.mxu0 0
  %111 = vmatpush1.bf16.msra.mxu0 0
  %112 = vmatprep.subr.bf16.mxu0 0
  %113 = vmatpush1.bf16.msra.mxu0 0
  %114 = vmatprep.subr.bf16.mxu0 0
  %115 = vmatpush1.bf16.msra.mxu0 0
  %116 = vmatprep.subr.bf16.mxu0 0
  %117 = vmatpush1.bf16.msra.mxu0 0
  %118 = vmatprep.subr.bf16.mxu0 0
  %119 = vmatpush1.bf16.msra.mxu0 0
  %120 = vmatprep.subr.bf16.mxu0 0
  %121 = vmatpush1.bf16.msra.mxu0 0
  %122 = vmatprep.subr.bf16.mxu0 0
  %123 = vmatpush1.bf16.msra.mxu0 0
  %124 = vmatprep.subr.bf16.mxu0 0
  %125 = vmatpush1.bf16.msra.mxu0 0
  %126 = vmatprep.subr.bf16.mxu0 0
  %127 = vmatpush1.bf16.msra.mxu0 0
  %128 = vmatprep.subr.bf16.mxu0 0
  %129 = vmatpush1.bf16.msra.mxu0 0
  %130 = vmatprep.subr.bf16.mxu0 0
  %131 = vmatpush1.bf16.msra.mxu0 0
  %132 = vmatprep.subr.bf16.mxu0 0
  %133 = vmatpush1.bf16.msra.mxu0 0
  %134 = vmatprep.subr.bf16.mxu0 0
  %135 = vmatpush1.bf16.msra.mxu0 0
  %136 = vmatprep.subr.bf16.mxu0 0
  %137 = vmatpush1.bf16.msra.mxu0 0
  %138 = vmatprep.mubr.bf16.mxu0 0
  %139 = vmatmul.mubr.bf16.gmra.mrb[0].mxu0 %v104
  %v140 = vpop.f32.mrb[0].mxu0
  %v141 = vadd.f32 0.0, %v140
  %v142 = vpop.f32.mrb[0].mxu0
  %v143 = vpop.f32.mrb[0].mxu0
  %v144 = vpop.f32.mrb[0].mxu0
  %145 = vdwg.mxu0
  %v146 = vmax.f32 %v141, 1e-24
  %v147 = vrsqrt.pop %v146
  %v148 = vmul.f32 %v82, %v147
  %v149 = vpack.c.bf16 %v148, %v148
  %v150 = vld [vmem:[%s3] sm:$0xf]
  %v151 = vld [vmem:[%s3 + $0x4] sm:$0xf]
  %v152 = vld [vmem:[%s3 + $0x8] sm:$0xf]
  %v153 = vld [vmem:[%s3 + $0xc] sm:$0xf]
  %v154 = vld [vmem:[%s3 + $0x10] sm:$0xf]
  %v155 = vld [vmem:[%s3 + $0x14] sm:$0xf]
  %v156 = vld [vmem:[%s3 + $0x18] sm:$0xf]
  %v157 = vld [vmem:[%s3 + $0x1c] sm:$0xf]
  %v158 = vld [vmem:[%s3 + $0x20] sm:$0xf]
  %v159 = vld [vmem:[%s3 + $0x24] sm:$0xf]
  %v160 = vld [vmem:[%s3 + $0x28] sm:$0xf]
  %v161 = vld [vmem:[%s3 + $0x2c] sm:$0xf]
  %v162 = vld [vmem:[%s3 + $0x30] sm:$0xf]
  %v163 = vld [vmem:[%s3 + $0x34] sm:$0xf]
  %v164 = vld [vmem:[%s3 + $0x38] sm:$0xf]
  %v165 = vld [vmem:[%s3 + $0x3c] sm:$0xf]
  %v182 = vunpack.c.l.b16 %v150
  %v183 = vunpack.c.l.b16 %v151
  %v184 = vunpack.c.l.b16 %v152
  %v185 = vunpack.c.l.b16 %v153
  %v186 = vunpack.c.l.b16 %v154
  %v187 = vunpack.c.l.b16 %v155
  %v188 = vunpack.c.l.b16 %v156
  %v189 = vunpack.c.l.b16 %v157
  %v190 = vunpack.c.l.b16 %v158
  %v191 = vunpack.c.l.b16 %v159
  %v192 = vunpack.c.l.b16 %v160
  %v193 = vunpack.c.l.b16 %v161
  %v194 = vunpack.c.l.b16 %v162
  %v195 = vunpack.c.l.b16 %v163
  %v196 = vunpack.c.l.b16 %v164
  %v197 = vunpack.c.l.b16 %v165
  %v198 = vpack.c.b16 %v183, %v182
  %v199 = vpack.c.b16 %v185, %v184
  %v200 = vpack.c.b16 %v187, %v186
  %v201 = vpack.c.b16 %v189, %v188
  %v202 = vpack.c.b16 %v191, %v190
  %v203 = vpack.c.b16 %v193, %v192
  %v204 = vpack.c.b16 %v195, %v194
  %v205 = vpack.c.b16 %v197, %v196
  %214 = vmatprep.subr.bf16.mxu0 0
  %215 = vmatpush1.bf16.msra.mxu0 %v198
  %216 = vmatprep.subr.bf16.mxu0 0
  %217 = vmatpush1.bf16.msra.mxu0 %v199
  %218 = vmatprep.subr.bf16.mxu0 0
  %219 = vmatpush1.bf16.msra.mxu0 %v200
  %220 = vmatprep.subr.bf16.mxu0 0
  %221 = vmatpush1.bf16.msra.mxu0 %v201
  %222 = vmatprep.subr.bf16.mxu0 0
  %223 = vmatpush1.bf16.msra.mxu0 %v202
  %224 = vmatprep.subr.bf16.mxu0 0
  %225 = vmatpush1.bf16.msra.mxu0 %v203
  %226 = vmatprep.subr.bf16.mxu0 0
  %227 = vmatpush1.bf16.msra.mxu0 %v204
  %228 = vmatprep.subr.bf16.mxu0 0
  %229 = vmatpush1.bf16.msra.mxu0 %v205
  %230 = vmatprep.subr.bf16.mxu0 0
  %231 = vmatpush1.bf16.msra.mxu0 0
  %232 = vmatprep.subr.bf16.mxu0 0
  %233 = vmatpush1.bf16.msra.mxu0 0
  %234 = vmatprep.subr.bf16.mxu0 0
  %235 = vmatpush1.bf16.msra.mxu0 0
  %236 = vmatprep.subr.bf16.mxu0 0
  %237 = vmatpush1.bf16.msra.mxu0 0
  %238 = vmatprep.subr.bf16.mxu0 0
  %239 = vmatpush1.bf16.msra.mxu0 0
  %240 = vmatprep.subr.bf16.mxu0 0
  %241 = vmatpush1.bf16.msra.mxu0 0
  %242 = vmatprep.subr.bf16.mxu0 0
  %243 = vmatpush1.bf16.msra.mxu0 0
  %244 = vmatprep.subr.bf16.mxu0 0
  %245 = vmatpush1.bf16.msra.mxu0 0
  %246 = vmatprep.mubr.bf16.mxu0 0
  %247 = vmatmul.mubr.bf16.gmra.mrb[0].mxu0 %v149
  %v248 = vpop.f32.mrb[0].mxu0
  %v249 = vadd.f32 0.0, %v248
  %v250 = vpop.f32.mrb[0].mxu0
  %v251 = vpop.f32.mrb[0].mxu0
  %v252 = vpop.f32.mrb[0].mxu0
  %253 = vdwg.mxu0
  %254 = vst [vmem:[%s5] sm:$0x3] %v249
  %v255 = vld [vmem:[%s4] sm:$0xf]
  %v256 = vld [vmem:[%s4 + $0x4] sm:$0xf]
  %v257 = vld [vmem:[%s4 + $0x8] sm:$0xf]
  %v258 = vld [vmem:[%s4 + $0xc] sm:$0xf]
  %v259 = vld [vmem:[%s4 + $0x10] sm:$0xf]
  %v260 = vld [vmem:[%s4 + $0x14] sm:$0xf]
  %v261 = vld [vmem:[%s4 + $0x18] sm:$0xf]
  %v262 = vld [vmem:[%s4 + $0x1c] sm:$0xf]
  %v263 = vld [vmem:[%s4 + $0x20] sm:$0xf]
  %v264 = vld [vmem:[%s4 + $0x24] sm:$0xf]
  %v265 = vld [vmem:[%s4 + $0x28] sm:$0xf]
  %v266 = vld [vmem:[%s4 + $0x2c] sm:$0xf]
  %v267 = vld [vmem:[%s4 + $0x30] sm:$0xf]
  %v268 = vld [vmem:[%s4 + $0x34] sm:$0xf]
  %v269 = vld [vmem:[%s4 + $0x38] sm:$0xf]
  %v270 = vld [vmem:[%s4 + $0x3c] sm:$0xf]
  %v287 = vunpack.c.l.b16 %v255
  %v288 = vunpack.c.l.b16 %v256
  %v289 = vunpack.c.l.b16 %v257
  %v290 = vunpack.c.l.b16 %v258
  %v291 = vunpack.c.l.b16 %v259
  %v292 = vunpack.c.l.b16 %v260
  %v293 = vunpack.c.l.b16 %v261
  %v294 = vunpack.c.l.b16 %v262
  %v295 = vunpack.c.l.b16 %v263
  %v296 = vunpack.c.l.b16 %v264
  %v297 = vunpack.c.l.b16 %v265
  %v298 = vunpack.c.l.b16 %v266
  %v299 = vunpack.c.l.b16 %v267
  %v300 = vunpack.c.l.b16 %v268
  %v301 = vunpack.c.l.b16 %v269
  %v302 = vunpack.c.l.b16 %v270
  %v303 = vpack.c.b16 %v288, %v287
  %v304 = vpack.c.b16 %v290, %v289
  %v305 = vpack.c.b16 %v292, %v291
  %v306 = vpack.c.b16 %v294, %v293
  %v307 = vpack.c.b16 %v296, %v295
  %v308 = vpack.c.b16 %v298, %v297
  %v309 = vpack.c.b16 %v300, %v299
  %v310 = vpack.c.b16 %v302, %v301
  %319 = vmatprep.subr.bf16.mxu0 0
  %320 = vmatpush1.bf16.msra.mxu0 %v303
  %321 = vmatprep.subr.bf16.mxu0 0
  %322 = vmatpush1.bf16.msra.mxu0 %v304
  %323 = vmatprep.subr.bf16.mxu0 0
  %324 = vmatpush1.bf16.msra.mxu0 %v305
  %325 = vmatprep.subr.bf16.mxu0 0
  %326 = vmatpush1.bf16.msra.mxu0 %v306
  %327 = vmatprep.subr.bf16.mxu0 0
  %328 = vmatpush1.bf16.msra.mxu0 %v307
  %329 = vmatprep.subr.bf16.mxu0 0
  %330 = vmatpush1.bf16.msra.mxu0 %v308
  %331 = vmatprep.subr.bf16.mxu0 0
  %332 = vmatpush1.bf16.msra.mxu0 %v309
  %333 = vmatprep.subr.bf16.mxu0 0
  %334 = vmatpush1.bf16.msra.mxu0 %v310
  %335 = vmatprep.subr.bf16.mxu0 0
  %336 = vmatpush1.bf16.msra.mxu0 0
  %337 = vmatprep.subr.bf16.mxu0 0
  %338 = vmatpush1.bf16.msra.mxu0 0
  %339 = vmatprep.subr.bf16.mxu0 0
  %340 = vmatpush1.bf16.msra.mxu0 0
  %341 = vmatprep.subr.bf16.mxu0 0
  %342 = vmatpush1.bf16.msra.mxu0 0
  %343 = vmatprep.subr.bf16.mxu0 0
  %344 = vmatpush1.bf16.msra.mxu0 0
  %345 = vmatprep.subr.bf16.mxu0 0
  %346 = vmatpush1.bf16.msra.mxu0 0
  %347 = vmatprep.subr.bf16.mxu0 0
  %348 = vmatpush1.bf16.msra.mxu0 0
  %349 = vmatprep.subr.bf16.mxu0 0
  %350 = vmatpush1.bf16.msra.mxu0 0
  %351 = vmatprep.mubr.bf16.mxu0 0
  %352 = vmatmul.mubr.bf16.gmra.mrb[0].mxu0 %v149
  %v353 = vpop.f32.mrb[0].mxu0
  %v354 = vadd.f32 0.0, %v353
  %v355 = vpop.f32.mrb[0].mxu0
  %v356 = vpop.f32.mrb[0].mxu0
  %v357 = vpop.f32.mrb[0].mxu0
  %358 = vdwg.mxu0
  %359 = vst [vmem:[%s6] sm:$0x3] %v354
  // Predicated region
  $region22: #{coda_prompt_forward.1} parent=0 // pred_check
    _
  $region23: #{coda_prompt_forward.1} parent=0 // pred_check_branch
    %361 = sbr.rel (0) target = $region25
  $region24: #{coda_prompt_forward.1} parent=0 // pred_region
    _
  $region25: #{coda_prompt_forward.1} parent=0 // pred_fallthru
    _
  // Predicated region
  $region26: #{coda_prompt_forward.1} parent=0 // pred_check
    _
  $region27: #{coda_prompt_forward.1} parent=0 // pred_check_branch
    %363 = sbr.rel (0) target = $region29
  $region28: #{coda_prompt_forward.1} parent=0 // pred_region
    _
  $region29: #{coda_prompt_forward.1} parent=0 // pred_fallthru
    _
  // Predicated region
  $region30: #{coda_prompt_forward.1} parent=0 // pred_check
    _
  $region31: #{coda_prompt_forward.1} parent=0 // pred_check_branch
    %365 = sbr.rel (0) target = $region33
  $region32: #{coda_prompt_forward.1} parent=0 // pred_region
    _
  $region33: #{coda_prompt_forward.1} parent=0 // pred_fallthru
    _
  // Predicated region
  $region34: #{coda_prompt_forward.1} parent=0 // pred_check
    _
  $region35: #{coda_prompt_forward.1} parent=0 // pred_check_branch
    %367 = sbr.rel (0) target = $region37
  $region36: #{coda_prompt_forward.1} parent=0 // pred_region
    _
  $region37: #{coda_prompt_forward.1} parent=0 // pred_fallthru
    _

</llo_original>
